<compile_context>
chip_gen: v7x
topology: tpu7x:2x2x1
jax: 0.10.0
libtpu: 0.0.40
codegen_flags: <defaults>
</compile_context>

<pallas_src>
import numpy as np
import jax
import jax.numpy as jnp
from jax.experimental import pallas as pl
from jax.experimental.pallas import tpu as pltpu


# ------------------------------- Pallas kernel ------------------------------ #
def _conv_kernel(x_ref, a_ref, o_ref):
    # x_ref: (B, C_in*HW)  f32   -- whole (small) batch, resident across steps
    # a_ref: (C_in*HW, Nt) bf16  -- column tile of the folded weight/gather matrix
    # o_ref: (B, Nt)       f32   -- column tile of the flattened NCHW output
    o_ref[...] = jnp.dot(x_ref[...].astype(jnp.bfloat16), a_ref[...],
                         preferred_element_type=jnp.float32)


# ------------------------------- MyConv forward ----------------------------- #
def my_conv_forward(x, weight, stride):
    """x: (B, C_in, H, W) NCHW f32; weight: (C_out, C_in, K, K); returns NCHW f32."""
    B, C_in, H, W = x.shape
    C_out, _, K, _ = weight.shape
    w_out = (H - K) // stride + 1
    HW, WW, KK = H * W, w_out * w_out, K * K
    N = C_out * WW

    # --- compile-time 0/1 gather pattern (numpy constant) -------------------
    #   tgt[t, m] = (stride*i + ki)*W + (stride*j + kj), t = ki*K+kj, m = i*w_out+j
    ki, kj = np.divmod(np.arange(KK), K)
    i, j = np.divmod(np.arange(WW), w_out)
    tgt = ((stride * i[None, :] + ki[:, None]) * W
           + (stride * j[None, :] + kj[:, None])).astype(np.int64)       # (KK, WW)
    S = np.zeros((KK, HW, WW), np.float32)
    S[np.arange(KK)[:, None], tgt, np.arange(WW)[None, :]] = 1.0         # (KK, HW, WW)

    # --- fold the weight into the gather pattern -----------------------------
    # A[ci*HW + p, co*WW + m] = sum_t weight[co,ci,ki,kj] * S[t, p, m]
    w_t = jnp.transpose(weight.reshape(C_out, C_in, KK), (2, 0, 1))      # (KK, C_out, C_in)
    A = jnp.einsum('tpm,toc->cpom', jnp.asarray(S), w_t)                 # (C_in, HW, C_out, WW)
    A = A.reshape(C_in * HW, N)

    # Pad the output/column dim to a multiple of 128 -> fully lane-dense stores
    # and a clean split into parallel column tiles.
    N_pad = ((N + 127) // 128) * 128
    A = jnp.pad(A, ((0, 0), (0, N_pad - N))).astype(jnp.bfloat16)        # (C_in*HW, N_pad)

    # 2 parallel steps when the padded width allows it (keeps both v7x
    # TensorCores busy); otherwise a single step (best for v5e/v6e anyway).
    n_tile = N_pad // 2 if (N_pad % 256 == 0) else N_pad
    n_steps = N_pad // n_tile

    # Free (metadata-only) NCHW reshape of x.
    x_flat = x.reshape(B, C_in * HW)

    out_flat = pl.pallas_call(
        _conv_kernel,
        out_shape=jax.ShapeDtypeStruct((B, N_pad), jnp.float32),
        grid_spec=pltpu.PrefetchScalarGridSpec(
            num_scalar_prefetch=0,
            grid=(n_steps,),
            in_specs=[
                pl.BlockSpec((B, C_in * HW), lambda n: (0, 0)),      # x: resident
                pl.BlockSpec((C_in * HW, n_tile), lambda n: (0, n)),  # A: column tile
            ],
            out_specs=pl.BlockSpec((B, n_tile), lambda n: (0, n)),
        ),
        compiler_params=pltpu.CompilerParams(
            dimension_semantics=("parallel",)),   # column tiles -> both TCs on v7x
    )(x_flat, A)

    # Drop the zero-padded columns; reshape is free and already NCHW ordered.
    return out_flat[:, :N].reshape(B, C_out, w_out, w_out)


# ------------------------------------ main ---------------------------------- #
if __name__ == "__main__":
    key = jax.random.PRNGKey(0)
    kx, kw = jax.random.split(key)

    # Shapes consistent with MyConv(in_channels=4, out_channels=8, kernel_size=3, stride=2)
    B, C_in, H, W = 2, 4, 16, 16
    C_out, K, stride = 8, 3, 2

    x = jax.random.normal(kx, (B, C_in, H, W), dtype=jnp.float32)
    # nn.init.normal_(weight, mean=0, std=0.1)
    weight = 0.1 * jax.random.normal(kw, (C_out, C_in, K, K), dtype=jnp.float32)

    out = jax.block_until_ready(my_conv_forward(x, weight, stride))

    # Reference: same semantics as the PyTorch loop (valid conv, no bias), in f32.
    ref = jax.lax.conv_general_dilated(
        x, weight, window_strides=(stride, stride), padding="VALID",
        dimension_numbers=("NCHW", "OIHW", "NCHW"))

    w_out = (H - K) // stride + 1
    assert out.shape == (B, C_out, w_out, w_out), out.shape
    # Single bf16 rounding per operand, f32 accumulation.
    max_err = float(jnp.max(jnp.abs(out - ref)))
    assert jnp.allclose(out, ref, atol=2e-2, rtol=2e-2), max_err
    print("KERNEL_OK")
</pallas_src>

<mosaic_0001>
module attributes {stable_mosaic.version = 11 : i64} {
  func.func @_conv_kernel(%arg0: i32, %arg1: memref<2x1024xf32, #tpu.memory_space<vmem>>, %arg2: memref<1024x256xbf16, #tpu.memory_space<vmem>>, %arg3: memref<2x256xf32, #tpu.memory_space<vmem>>) attributes {dimension_semantics = [#tpu.dimension_semantics<parallel>], iteration_bounds = array<i64: 2>, scalar_prefetch = 0 : i64, scratch_operands = 0 : i64, tpu.core_type = #tpu.core_type<tc>, window_params = [{pipeline_mode = #tpu.pipeline_mode<synchronous>, transform_indices = @transform_0, window_bounds = array<i64: 2, 1024>}, {transform_indices = @transform_1, window_bounds = array<i64: 1024, 256>}, {transform_indices = @transform_2, window_bounds = array<i64: 2, 256>}]} {
    %c0 = arith.constant 0 : index
    %c0_0 = arith.constant 0 : index
    %0 = vector.load %arg1[%c0, %c0_0] : memref<2x1024xf32, #tpu.memory_space<vmem>>, vector<2x1024xf32>
    %1 = arith.truncf %0 : vector<2x1024xf32> to vector<2x1024xbf16>
    %c0_1 = arith.constant 0 : index
    %c0_2 = arith.constant 0 : index
    %2 = vector.load %arg2[%c0_1, %c0_2] : memref<1024x256xbf16, #tpu.memory_space<vmem>>, vector<1024x256xbf16>
    %cst = arith.constant dense<0.000000e+00> : vector<2x256xf32>
    %3 = tpu.matmul %1, %2, %cst {dimension_numbers = #tpu.dot_dimension_numbers<[1], [0], [0], [1], [0, 0, 1, 1], [], []>} : vector<2x1024xbf16>, vector<1024x256xbf16>, vector<2x256xf32> -> vector<2x256xf32>
    %c0_3 = arith.constant 0 : index
    %c0_4 = arith.constant 0 : index
    %4 = vector.load %arg3[%c0_3, %c0_4] : memref<2x256xf32, #tpu.memory_space<vmem>>, vector<2x256xf32>
    tpu.vector_store %arg3[%c0_3, %c0_4], %3 {strides = array<i32>} : memref<2x256xf32, #tpu.memory_space<vmem>>, vector<2x256xf32>,
    return
  }
  func.func @transform_0(%arg0: i32) -> (i32, i32) {
    %c0_i32 = arith.constant 0 : i32
    %c0_i32_0 = arith.constant 0 : i32
    %c0_i32_1 = arith.constant 0 : i32
    return %c0_i32, %c0_i32_0 : i32, i32
  }
  func.func @transform_1(%arg0: i32) -> (i32, i32) {
    %c0_i32 = arith.constant 0 : i32
    %c0_i32_0 = arith.constant 0 : i32
    return %c0_i32, %arg0 : i32, i32
  }
  func.func @transform_2(%arg0: i32) -> (i32, i32) {
    %c0_i32 = arith.constant 0 : i32
    %c0_i32_0 = arith.constant 0 : i32
    return %c0_i32, %arg0 : i32, i32
  }
}

</mosaic_0001>

<llo_original>
// kernel: tpu_custom_call.1
$region0: #{tpu_custom_call.1}
  #allocation0 [shape = 'u32[]', space=smem, size = 0x4, offset = 0x4, fixed_abs, tag = 'smem constant byte address 0x4 - core index']
  #allocation1 [shape = 'u32[144,128]{1,0:T(1,128)}', space=vmem, size = 0x12000, scoped, tag = 'internal scratch']
  %s0 = inlined_call_operand.hbm [shape: f32[2,1024], index: 0, kind: input, shape index: {}]
  %s1 = inlined_call_operand.hbm [shape: bf16[1024,512], index: 1, kind: input, shape index: {}]
  %s2 = inlined_call_operand.hbm [shape: f32[2,512], index: 2, kind: output, shape index: {}]
  %s3 = sld [smem:[#allocation0]]
  $region49: #{tpu_custom_call.1} parent=0
    _
  %s5 = ssub.s32 1, %s3
  %s6 = scalar_select 0, %s5, %s3
  $region1: #{tpu_custom_call.1} parent=0
    #allocation2 [shape = 'u8[8192]{0}', space=vmem, size = 0x2000, scoped, tag = 'input window, operand 0, single buffered']
    #allocation3 [shape = 's32[2]{0}', space=sflag, size = 0x8, scoped, tag = 'scoped memory for tpu_custom_call.1']
    #allocation4 [shape = 's32[2]{0}', space=sflag, size = 0x8, scoped, tag = 'scoped memory for tpu_custom_call.1']
    #allocation5 [shape = 'u8[1048576]{0}', space=vmem, size = 0x100000, scoped, tag = 'input window, operand 1']
    #allocation6 [shape = 's32[2]{0}', space=sflag, size = 0x8, scoped, tag = 'scoped memory for tpu_custom_call.1']
    #allocation7 [shape = 'u8[4096]{0}', space=vmem, size = 0x1000, scoped, tag = 'output window, operand 0']
    %7 = vsyncpa [#allocation3], 0
    %8 = vsyncpa [#allocation6], 0
    %s9 = scalar_lea.sflag [#allocation6], 1
    %10 = vsyncpa %s9, 0
    %11 = vsyncpa [#allocation4], 0
    %s12 = scalar_lea.sflag [#allocation4], 1
    %13 = vsyncpa %s12, 0
    loop: start=0, step=1, limit=4
    $region2: #{tpu_custom_call.1} parent=1 // loop_pre_header
      _
    $region3: #{tpu_custom_call.1} parent=1 // loop_header
      %s15 = sphi 0, %s19
      %p16 = scmp.ge.s32.totalorder %s15, 4
      %s23 = sphi 0, %s23
      %s25 = sphi 0, %s23
      %s26 = sphi 0, %s25
      %s40 = sphi 0, %s26
      %s46 = sphi 0, %s48
      %s49 = sphi 0, %s46
      %s50 = sphi 0, %s49
      %s66 = sphi 0, %s50
      %s72 = sphi 0, %s74
      %s75 = sphi 0, %s72
      %s76 = sphi 0, %s75
      %s92 = sphi 0, %s76
    $region4: #{tpu_custom_call.1} parent=1 // loop_header_branch
      %18 = sbr.rel (%p16) target = $region8
    $region5: #{tpu_custom_call.1} parent=1 // loop_body
      %s20 = ssub.s32 %s15, 1
      %s21 = ssub.s32 %s15, 2
      %s22 = sadd.s32 %s15, 1
      %s24 = sadd.s32 %s23, 1
      %p27 = scmp.eq.s32.totalorder %s15, 1
      %p28 = scmp.ne.s32.totalorder %s23, %s25
      %p29 = scmp.eq.s32.totalorder %s15, 0
      %p30 = por %p28, %p29
      %p31 = scmp.ne.s32.totalorder %s23, %s25
      %p32 = scmp.eq.s32.totalorder %s20, 1
      %p33 = por %p31, %p32
      %p34 = scmp.ne.s32.totalorder %s25, %s26
      %p35 = scmp.eq.s32.totalorder %s20, 0
      %p36 = por %p34, %p35
      %p37 = scmp.ne.s32.totalorder %s25, %s26
      %p38 = scmp.eq.s32.totalorder %s21, 1
      %p39 = por %p37, %p38
      %p41 = scmp.ne.s32.totalorder %s26, %s40
      %p42 = scmp.eq.s32.totalorder %s21, 0
      %p43 = por %p41, %p42
      %s44 = ssub.s32 %s15, %s22
      %p45 = scmp.eq.s32.totalorder %s44, 0
      %s47 = sadd.s32 %s46, 1
      %s48 = scalar_select %p45, %s46, %s47
      %p51 = pneg %p45
      %p52 = scmp.eq.s32.totalorder %s15, 1
      %p53 = por %p51, %p52
      %p54 = scmp.ne.s32.totalorder %s46, %s49
      %p55 = scmp.eq.s32.totalorder %s15, 0
      %p56 = por %p54, %p55
      %p57 = scmp.ne.s32.totalorder %s46, %s49
      %p58 = scmp.eq.s32.totalorder %s20, 1
      %p59 = por %p57, %p58
      %p60 = scmp.ne.s32.totalorder %s49, %s50
      %p61 = scmp.eq.s32.totalorder %s20, 0
      %p62 = por %p60, %p61
      %p63 = scmp.ne.s32.totalorder %s49, %s50
      %p64 = scmp.eq.s32.totalorder %s21, 1
      %p65 = por %p63, %p64
      %p67 = scmp.ne.s32.totalorder %s50, %s66
      %p68 = scmp.eq.s32.totalorder %s21, 0
      %p69 = por %p67, %p68
      %s70 = ssub.s32 %s15, %s22
      %p71 = scmp.eq.s32.totalorder %s70, 0
      %s73 = sadd.s32 %s72, 1
      %s74 = scalar_select %p71, %s72, %s73
      %p77 = pneg %p71
      %p78 = scmp.eq.s32.totalorder %s15, 1
      %p79 = por %p77, %p78
      %p80 = scmp.ne.s32.totalorder %s72, %s75
      %p81 = scmp.eq.s32.totalorder %s15, 0
      %p82 = por %p80, %p81
      %p83 = scmp.ne.s32.totalorder %s72, %s75
      %p84 = scmp.eq.s32.totalorder %s20, 1
      %p85 = por %p83, %p84
      %p86 = scmp.ne.s32.totalorder %s75, %s76
      %p87 = scmp.eq.s32.totalorder %s20, 0
      %p88 = por %p86, %p87
      %p89 = scmp.ne.s32.totalorder %s75, %s76
      %p90 = scmp.eq.s32.totalorder %s21, 1
      %p91 = por %p89, %p90
      %p93 = scmp.ne.s32.totalorder %s76, %s92
      %p94 = scmp.eq.s32.totalorder %s21, 0
      %p95 = por %p93, %p94
      %p96 = scmp.le.s32.totalorder 1, %s15
      %p97 = scmp.lt.s32.totalorder %s15, 3
      %p98 = pnand %p96, %p97
      %p99 = pneg %p98
      // Predicated region
      $region9: #{tpu_custom_call.1} parent=5 // pred_check
        _
      $region10: #{tpu_custom_call.1} parent=5 // pred_check_branch
        %101 = sbr.rel (%p98) target = $region12
      $region11: #{tpu_custom_call.1} parent=5 // pred_region
        %s102 = ssub.s32 %s15, 1
        // Predicated region
        $region13: #{tpu_custom_call.1} parent=11 // pred_check
          %p103 = pneg %p36
        $region14: #{tpu_custom_call.1} parent=11 // pred_check_branch
          %105 = sbr.rel (%p103) target = $region16
        $region15: #{tpu_custom_call.1} parent=11 // pred_region
          %s107 = ssub.s32 256, 256
          %108 = vsyncadd [#allocation3], %s107
          %s110 = sshll.u32 [#allocation2], 4
          %s111 = int_to_ptr.vmem [resolvable:$true] %s110
          %113 = dma.hbm_to_vmem [thread:$0]  %s0, 256, %s111, [#allocation3]
        $region16: #{tpu_custom_call.1} parent=11 // pred_fallthru
          _
      $region12: #{tpu_custom_call.1} parent=5 // pred_fallthru
        _
      %p114 = scmp.lt.s32.totalorder %s15, 2
      // Predicated region
      $region17: #{tpu_custom_call.1} parent=5 // pred_check
        %p115 = pneg %p114
      $region18: #{tpu_custom_call.1} parent=5 // pred_check_branch
        %117 = sbr.rel (%p115) target = $region20
      $region19: #{tpu_custom_call.1} parent=5 // pred_region
        // Predicated region
        $region21: #{tpu_custom_call.1} parent=19 // pred_check
          %p118 = pneg %p56
        $region22: #{tpu_custom_call.1} parent=19 // pred_check_branch
          %120 = sbr.rel (%p118) target = $region24
        $region23: #{tpu_custom_call.1} parent=19 // pred_region
          %s121 = sand.u32 %s46, 1
          %s122 = scalar_lea.sflag [#allocation6], %s121
          %s123 = sand.u32 %s46, 1
          %s124 = smul.addr %s123, 1024
          %s125 = scalar_lea.vmem [#allocation5], %s124
          %s126 = smul.u32 2, %s15
          %s128 = ssub.s32 16384, 16384
          %129 = vsyncadd %s122, %s128
          %s130 = smul.addr %s126, 64
          %s131 = scalar_lea.hbm %s1, %s130
          %s132 = sshll.u32 %s125, 4
          %s133 = int_to_ptr.vmem [resolvable:$true] %s132
          %138 = dma.hbm_to_vmem [thread:$0]  %s131, 16384, %s133, %s122, 256, 128, 8
        $region24: #{tpu_custom_call.1} parent=19 // pred_fallthru
          _
      $region20: #{tpu_custom_call.1} parent=5 // pred_fallthru
        _
      %p139 = scmp.le.s32.totalorder 1, %s15
      %p140 = scmp.lt.s32.totalorder %s15, 3
      %p141 = pnand %p139, %p140
      %p142 = pneg %p141
      // Predicated region
      $region25: #{tpu_custom_call.1} parent=5 // pred_check
        _
      $region26: #{tpu_custom_call.1} parent=5 // pred_check_branch
        %144 = sbr.rel (%p141) target = $region28
      $region27: #{tpu_custom_call.1} parent=5 // pred_region
        %s145 = ssub.s32 %s15, 1
        // Predicated region
        $region29: #{tpu_custom_call.1} parent=27 // pred_check
          %p146 = pneg %p36
        $region30: #{tpu_custom_call.1} parent=27 // pred_check_branch
          %148 = sbr.rel (%p146) target = $region32
        $region31: #{tpu_custom_call.1} parent=27 // pred_region
          %149 = dma.done [#allocation3], 256
        $region32: #{tpu_custom_call.1} parent=27 // pred_fallthru
          _
        %s150 = sand.u32 %s49, 1
        %s151 = scalar_lea.sflag [#allocation6], %s150
        %s152 = sand.u32 %s49, 1
        %s153 = smul.addr %s152, 1024
        %s154 = scalar_lea.vmem [#allocation5], %s153
        // Predicated region
        $region33: #{tpu_custom_call.1} parent=27 // pred_check
          %p155 = pneg %p62
        $region34: #{tpu_custom_call.1} parent=27 // pred_check_branch
          %157 = sbr.rel (%p155) target = $region36
        $region35: #{tpu_custom_call.1} parent=27 // pred_region
          %158 = dma.done %s151, 16384
        $region36: #{tpu_custom_call.1} parent=27 // pred_fallthru
          _
        %p159 = pneg %p36
        %p160 = pneg %p33
        %s161 = sand.u32 %s49, 1
        %s162 = scalar_lea.sflag [#allocation6], %s161
        %s163 = sand.u32 %s49, 1
        %s164 = smul.addr %s163, 1024
        %s165 = scalar_lea.vmem [#allocation5], %s164
        %p166 = pneg %p62
        %p167 = pneg %p59
        %p168 = pneg %p88
        %p169 = pneg %p85
        %s170 = sand.u32 %s75, 1
        %s171 = scalar_lea.sflag [#allocation4], %s170
        %s172 = sand.u32 %s75, 1
        %s173 = smul.addr %s172, 4
        %s174 = scalar_lea.vmem [#allocation7], %s173
        %s175 = smul.u32 2, %s20
        %s176 = smul.u32 2, %s20
        %v177 = vld [vmem:[#allocation2] sm:$0xff]
        %v178 = vld [vmem:[#allocation2 + $0x8] sm:$0xff]
        %v181 = vcombine.high %v177, %v177
        %v183 = vunpack.c.l.s4 1983009808
        %v184 = vunpack.c.0.s8 %v183
        %v185 = vlaneseq
        %v186 = vshrl.u32 %v185, 7
        %v187 = vsub.s32 %v184, %v186
        %v188 = vrot.slane %v177, %v187
        %v190 = vunpack.c.l.s4 1983009808
        %v191 = vunpack.c.0.s8 %v190
        %v192 = vlaneseq
        %v193 = vshrl.u32 %v192, 7
        %v194 = vsub.s32 %v191, %v193
        %v195 = vrot.slane %v181, %v194
        %v196 = vcombine.high %v188, %v188
        %v197 = vcombine.high %v195, %v195
        %v198 = vcombine.high %v178, %v178
        %v200 = vunpack.c.l.s4 1983009808
        %v201 = vunpack.c.0.s8 %v200
        %v202 = vlaneseq
        %v203 = vshrl.u32 %v202, 7
        %v204 = vsub.s32 %v201, %v203
        %v205 = vrot.slane %v178, %v204
        %v207 = vunpack.c.l.s4 1983009808
        %v208 = vunpack.c.0.s8 %v207
        %v209 = vlaneseq
        %v210 = vshrl.u32 %v209, 7
        %v211 = vsub.s32 %v208, %v210
        %v212 = vrot.slane %v198, %v211
        %v213 = vcombine.high %v205, %v205
        %v214 = vcombine.high %v212, %v212
        %v223 = vpack.c.bf16 %v188, %v188
        %v224 = vpack.c.bf16 %v196, %v196
        %v225 = vpack.c.bf16 %v195, %v195
        %v226 = vpack.c.bf16 %v197, %v197
        %v227 = vpack.c.bf16 %v205, %v205
        %v228 = vpack.c.bf16 %v213, %v213
        %v229 = vpack.c.bf16 %v212, %v212
        %v230 = vpack.c.bf16 %v214, %v214
        %v231 = vld [vmem:[%s154] sm:$0xff]
        %v232 = vld [vmem:[%s154 + $0x8] sm:$0xff]
        %v233 = vld [vmem:[%s154 + $0x10] sm:$0xff]
        %v234 = vld [vmem:[%s154 + $0x18] sm:$0xff]
        %v235 = vld [vmem:[%s154 + $0x20] sm:$0xff]
        %v236 = vld [vmem:[%s154 + $0x28] sm:$0xff]
        %v237 = vld [vmem:[%s154 + $0x30] sm:$0xff]
        %v238 = vld [vmem:[%s154 + $0x38] sm:$0xff]
        %v239 = vld [vmem:[%s154 + $0x40] sm:$0xff]
        %v240 = vld [vmem:[%s154 + $0x48] sm:$0xff]
        %v241 = vld [vmem:[%s154 + $0x50] sm:$0xff]
        %v242 = vld [vmem:[%s154 + $0x58] sm:$0xff]
        %v243 = vld [vmem:[%s154 + $0x60] sm:$0xff]
        %v244 = vld [vmem:[%s154 + $0x68] sm:$0xff]
        %v245 = vld [vmem:[%s154 + $0x70] sm:$0xff]
        %v246 = vld [vmem:[%s154 + $0x78] sm:$0xff]
        %v247 = vld [vmem:[%s154 + $0x80] sm:$0xff]
        %v248 = vld [vmem:[%s154 + $0x88] sm:$0xff]
        %v249 = vld [vmem:[%s154 + $0x90] sm:$0xff]
        %v250 = vld [vmem:[%s154 + $0x98] sm:$0xff]
        %v251 = vld [vmem:[%s154 + $0xa0] sm:$0xff]
        %v252 = vld [vmem:[%s154 + $0xa8] sm:$0xff]
        %v253 = vld [vmem:[%s154 + $0xb0] sm:$0xff]
        %v254 = vld [vmem:[%s154 + $0xb8] sm:$0xff]
        %v255 = vld [vmem:[%s154 + $0xc0] sm:$0xff]
        %v256 = vld [vmem:[%s154 + $0xc8] sm:$0xff]
        %v257 = vld [vmem:[%s154 + $0xd0] sm:$0xff]
        %v258 = vld [vmem:[%s154 + $0xd8] sm:$0xff]
        %v259 = vld [vmem:[%s154 + $0xe0] sm:$0xff]
        %v260 = vld [vmem:[%s154 + $0xe8] sm:$0xff]
        %v261 = vld [vmem:[%s154 + $0xf0] sm:$0xff]
        %v262 = vld [vmem:[%s154 + $0xf8] sm:$0xff]
        %v263 = vld [vmem:[%s154 + $0x100] sm:$0xff]
        %v264 = vld [vmem:[%s154 + $0x108] sm:$0xff]
        %v265 = vld [vmem:[%s154 + $0x110] sm:$0xff]
        %v266 = vld [vmem:[%s154 + $0x118] sm:$0xff]
        %v267 = vld [vmem:[%s154 + $0x120] sm:$0xff]
        %v268 = vld [vmem:[%s154 + $0x128] sm:$0xff]
        %v269 = vld [vmem:[%s154 + $0x130] sm:$0xff]
        %v270 = vld [vmem:[%s154 + $0x138] sm:$0xff]
        %v271 = vld [vmem:[%s154 + $0x140] sm:$0xff]
        %v272 = vld [vmem:[%s154 + $0x148] sm:$0xff]
        %v273 = vld [vmem:[%s154 + $0x150] sm:$0xff]
        %v274 = vld [vmem:[%s154 + $0x158] sm:$0xff]
        %v275 = vld [vmem:[%s154 + $0x160] sm:$0xff]
        %v276 = vld [vmem:[%s154 + $0x168] sm:$0xff]
        %v277 = vld [vmem:[%s154 + $0x170] sm:$0xff]
        %v278 = vld [vmem:[%s154 + $0x178] sm:$0xff]
        %v279 = vld [vmem:[%s154 + $0x180] sm:$0xff]
        %v280 = vld [vmem:[%s154 + $0x188] sm:$0xff]
        %v281 = vld [vmem:[%s154 + $0x190] sm:$0xff]
        %v282 = vld [vmem:[%s154 + $0x198] sm:$0xff]
        %v283 = vld [vmem:[%s154 + $0x1a0] sm:$0xff]
        %v284 = vld [vmem:[%s154 + $0x1a8] sm:$0xff]
        %v285 = vld [vmem:[%s154 + $0x1b0] sm:$0xff]
        %v286 = vld [vmem:[%s154 + $0x1b8] sm:$0xff]
        %v287 = vld [vmem:[%s154 + $0x1c0] sm:$0xff]
        %v288 = vld [vmem:[%s154 + $0x1c8] sm:$0xff]
        %v289 = vld [vmem:[%s154 + $0x1d0] sm:$0xff]
        %v290 = vld [vmem:[%s154 + $0x1d8] sm:$0xff]
        %v291 = vld [vmem:[%s154 + $0x1e0] sm:$0xff]
        %v292 = vld [vmem:[%s154 + $0x1e8] sm:$0xff]
        %v293 = vld [vmem:[%s154 + $0x1f0] sm:$0xff]
        %v294 = vld [vmem:[%s154 + $0x1f8] sm:$0xff]
        %v295 = vld [vmem:[%s154 + $0x200] sm:$0xff]
        %v296 = vld [vmem:[%s154 + $0x208] sm:$0xff]
        %v297 = vld [vmem:[%s154 + $0x210] sm:$0xff]
        %v298 = vld [vmem:[%s154 + $0x218] sm:$0xff]
        %v299 = vld [vmem:[%s154 + $0x220] sm:$0xff]
        %v300 = vld [vmem:[%s154 + $0x228] sm:$0xff]
        %v301 = vld [vmem:[%s154 + $0x230] sm:$0xff]
        %v302 = vld [vmem:[%s154 + $0x238] sm:$0xff]
        %v303 = vld [vmem:[%s154 + $0x240] sm:$0xff]
        %v304 = vld [vmem:[%s154 + $0x248] sm:$0xff]
        %v305 = vld [vmem:[%s154 + $0x250] sm:$0xff]
        %v306 = vld [vmem:[%s154 + $0x258] sm:$0xff]
        %v307 = vld [vmem:[%s154 + $0x260] sm:$0xff]
        %v308 = vld [vmem:[%s154 + $0x268] sm:$0xff]
        %v309 = vld [vmem:[%s154 + $0x270] sm:$0xff]
        %v310 = vld [vmem:[%s154 + $0x278] sm:$0xff]
        %v311 = vld [vmem:[%s154 + $0x280] sm:$0xff]
        %v312 = vld [vmem:[%s154 + $0x288] sm:$0xff]
        %v313 = vld [vmem:[%s154 + $0x290] sm:$0xff]
        %v314 = vld [vmem:[%s154 + $0x298] sm:$0xff]
        %v315 = vld [vmem:[%s154 + $0x2a0] sm:$0xff]
        %v316 = vld [vmem:[%s154 + $0x2a8] sm:$0xff]
        %v317 = vld [vmem:[%s154 + $0x2b0] sm:$0xff]
        %v318 = vld [vmem:[%s154 + $0x2b8] sm:$0xff]
        %v319 = vld [vmem:[%s154 + $0x2c0] sm:$0xff]
        %v320 = vld [vmem:[%s154 + $0x2c8] sm:$0xff]
        %v321 = vld [vmem:[%s154 + $0x2d0] sm:$0xff]
        %v322 = vld [vmem:[%s154 + $0x2d8] sm:$0xff]
        %v323 = vld [vmem:[%s154 + $0x2e0] sm:$0xff]
        %v324 = vld [vmem:[%s154 + $0x2e8] sm:$0xff]
        %v325 = vld [vmem:[%s154 + $0x2f0] sm:$0xff]
        %v326 = vld [vmem:[%s154 + $0x2f8] sm:$0xff]
        %v327 = vld [vmem:[%s154 + $0x300] sm:$0xff]
        %v328 = vld [vmem:[%s154 + $0x308] sm:$0xff]
        %v329 = vld [vmem:[%s154 + $0x310] sm:$0xff]
        %v330 = vld [vmem:[%s154 + $0x318] sm:$0xff]
        %v331 = vld [vmem:[%s154 + $0x320] sm:$0xff]
        %v332 = vld [vmem:[%s154 + $0x328] sm:$0xff]
        %v333 = vld [vmem:[%s154 + $0x330] sm:$0xff]
        %v334 = vld [vmem:[%s154 + $0x338] sm:$0xff]
        %v335 = vld [vmem:[%s154 + $0x340] sm:$0xff]
        %v336 = vld [vmem:[%s154 + $0x348] sm:$0xff]
        %v337 = vld [vmem:[%s154 + $0x350] sm:$0xff]
        %v338 = vld [vmem:[%s154 + $0x358] sm:$0xff]
        %v339 = vld [vmem:[%s154 + $0x360] sm:$0xff]
        %v340 = vld [vmem:[%s154 + $0x368] sm:$0xff]
        %v341 = vld [vmem:[%s154 + $0x370] sm:$0xff]
        %v342 = vld [vmem:[%s154 + $0x378] sm:$0xff]
        %v343 = vld [vmem:[%s154 + $0x380] sm:$0xff]
        %v344 = vld [vmem:[%s154 + $0x388] sm:$0xff]
        %v345 = vld [vmem:[%s154 + $0x390] sm:$0xff]
        %v346 = vld [vmem:[%s154 + $0x398] sm:$0xff]
        %v347 = vld [vmem:[%s154 + $0x3a0] sm:$0xff]
        %v348 = vld [vmem:[%s154 + $0x3a8] sm:$0xff]
        %v349 = vld [vmem:[%s154 + $0x3b0] sm:$0xff]
        %v350 = vld [vmem:[%s154 + $0x3b8] sm:$0xff]
        %v351 = vld [vmem:[%s154 + $0x3c0] sm:$0xff]
        %v352 = vld [vmem:[%s154 + $0x3c8] sm:$0xff]
        %v353 = vld [vmem:[%s154 + $0x3d0] sm:$0xff]
        %v354 = vld [vmem:[%s154 + $0x3d8] sm:$0xff]
        %v355 = vld [vmem:[%s154 + $0x3e0] sm:$0xff]
        %v356 = vld [vmem:[%s154 + $0x3e8] sm:$0xff]
        %v357 = vld [vmem:[%s154 + $0x3f0] sm:$0xff]
        %v358 = vld [vmem:[%s154 + $0x3f8] sm:$0xff]
        %v487 = vunpack.c.l.b16 %v231
        %v488 = vunpack.c.h.b16 %v231
        %v489 = vunpack.c.l.b16 %v232
        %v490 = vunpack.c.h.b16 %v232
        %v491 = vunpack.c.l.b16 %v233
        %v492 = vunpack.c.h.b16 %v233
        %v493 = vunpack.c.l.b16 %v234
        %v494 = vunpack.c.h.b16 %v234
        %v495 = vunpack.c.l.b16 %v235
        %v496 = vunpack.c.h.b16 %v235
        %v497 = vunpack.c.l.b16 %v236
        %v498 = vunpack.c.h.b16 %v236
        %v499 = vunpack.c.l.b16 %v237
        %v500 = vunpack.c.h.b16 %v237
        %v501 = vunpack.c.l.b16 %v238
        %v502 = vunpack.c.h.b16 %v238
        %v503 = vunpack.c.l.b16 %v239
        %v504 = vunpack.c.h.b16 %v239
        %v505 = vunpack.c.l.b16 %v240
        %v506 = vunpack.c.h.b16 %v240
        %v507 = vunpack.c.l.b16 %v241
        %v508 = vunpack.c.h.b16 %v241
        %v509 = vunpack.c.l.b16 %v242
        %v510 = vunpack.c.h.b16 %v242
        %v511 = vunpack.c.l.b16 %v243
        %v512 = vunpack.c.h.b16 %v243
        %v513 = vunpack.c.l.b16 %v244
        %v514 = vunpack.c.h.b16 %v244
        %v515 = vunpack.c.l.b16 %v245
        %v516 = vunpack.c.h.b16 %v245
        %v517 = vunpack.c.l.b16 %v246
        %v518 = vunpack.c.h.b16 %v246
        %v519 = vunpack.c.l.b16 %v247
        %v520 = vunpack.c.h.b16 %v247
        %v521 = vunpack.c.l.b16 %v248
        %v522 = vunpack.c.h.b16 %v248
        %v523 = vunpack.c.l.b16 %v249
        %v524 = vunpack.c.h.b16 %v249
        %v525 = vunpack.c.l.b16 %v250
        %v526 = vunpack.c.h.b16 %v250
        %v527 = vunpack.c.l.b16 %v251
        %v528 = vunpack.c.h.b16 %v251
        %v529 = vunpack.c.l.b16 %v252
        %v530 = vunpack.c.h.b16 %v252
        %v531 = vunpack.c.l.b16 %v253
        %v532 = vunpack.c.h.b16 %v253
        %v533 = vunpack.c.l.b16 %v254
        %v534 = vunpack.c.h.b16 %v254
        %v535 = vunpack.c.l.b16 %v255
        %v536 = vunpack.c.h.b16 %v255
        %v537 = vunpack.c.l.b16 %v256
        %v538 = vunpack.c.h.b16 %v256
        %v539 = vunpack.c.l.b16 %v257
        %v540 = vunpack.c.h.b16 %v257
        %v541 = vunpack.c.l.b16 %v258
        %v542 = vunpack.c.h.b16 %v258
        %v543 = vunpack.c.l.b16 %v259
        %v544 = vunpack.c.h.b16 %v259
        %v545 = vunpack.c.l.b16 %v260
        %v546 = vunpack.c.h.b16 %v260
        %v547 = vunpack.c.l.b16 %v261
        %v548 = vunpack.c.h.b16 %v261
        %v549 = vunpack.c.l.b16 %v262
        %v550 = vunpack.c.h.b16 %v262
        %v551 = vunpack.c.l.b16 %v263
        %v552 = vunpack.c.h.b16 %v263
        %v553 = vunpack.c.l.b16 %v264
        %v554 = vunpack.c.h.b16 %v264
        %v555 = vunpack.c.l.b16 %v265
        %v556 = vunpack.c.h.b16 %v265
        %v557 = vunpack.c.l.b16 %v266
        %v558 = vunpack.c.h.b16 %v266
        %v559 = vunpack.c.l.b16 %v267
        %v560 = vunpack.c.h.b16 %v267
        %v561 = vunpack.c.l.b16 %v268
        %v562 = vunpack.c.h.b16 %v268
        %v563 = vunpack.c.l.b16 %v269
        %v564 = vunpack.c.h.b16 %v269
        %v565 = vunpack.c.l.b16 %v270
        %v566 = vunpack.c.h.b16 %v270
        %v567 = vunpack.c.l.b16 %v271
        %v568 = vunpack.c.h.b16 %v271
        %v569 = vunpack.c.l.b16 %v272
        %v570 = vunpack.c.h.b16 %v272
        %v571 = vunpack.c.l.b16 %v273
        %v572 = vunpack.c.h.b16 %v273
        %v573 = vunpack.c.l.b16 %v274
        %v574 = vunpack.c.h.b16 %v274
        %v575 = vunpack.c.l.b16 %v275
        %v576 = vunpack.c.h.b16 %v275
        %v577 = vunpack.c.l.b16 %v276
        %v578 = vunpack.c.h.b16 %v276
        %v579 = vunpack.c.l.b16 %v277
        %v580 = vunpack.c.h.b16 %v277
        %v581 = vunpack.c.l.b16 %v278
        %v582 = vunpack.c.h.b16 %v278
        %v583 = vunpack.c.l.b16 %v279
        %v584 = vunpack.c.h.b16 %v279
        %v585 = vunpack.c.l.b16 %v280
        %v586 = vunpack.c.h.b16 %v280
        %v587 = vunpack.c.l.b16 %v281
        %v588 = vunpack.c.h.b16 %v281
        %v589 = vunpack.c.l.b16 %v282
        %v590 = vunpack.c.h.b16 %v282
        %v591 = vunpack.c.l.b16 %v283
        %v592 = vunpack.c.h.b16 %v283
        %v593 = vunpack.c.l.b16 %v284
        %v594 = vunpack.c.h.b16 %v284
        %v595 = vunpack.c.l.b16 %v285
        %v596 = vunpack.c.h.b16 %v285
        %v597 = vunpack.c.l.b16 %v286
        %v598 = vunpack.c.h.b16 %v286
        %v599 = vunpack.c.l.b16 %v287
        %v600 = vunpack.c.h.b16 %v287
        %v601 = vunpack.c.l.b16 %v288
        %v602 = vunpack.c.h.b16 %v288
        %v603 = vunpack.c.l.b16 %v289
        %v604 = vunpack.c.h.b16 %v289
        %v605 = vunpack.c.l.b16 %v290
        %v606 = vunpack.c.h.b16 %v290
        %v607 = vunpack.c.l.b16 %v291
        %v608 = vunpack.c.h.b16 %v291
        %v609 = vunpack.c.l.b16 %v292
        %v610 = vunpack.c.h.b16 %v292
        %v611 = vunpack.c.l.b16 %v293
        %v612 = vunpack.c.h.b16 %v293
        %v613 = vunpack.c.l.b16 %v294
        %v614 = vunpack.c.h.b16 %v294
        %v615 = vunpack.c.l.b16 %v295
        %v616 = vunpack.c.h.b16 %v295
        %v617 = vunpack.c.l.b16 %v296
        %v618 = vunpack.c.h.b16 %v296
        %v619 = vunpack.c.l.b16 %v297
        %v620 = vunpack.c.h.b16 %v297
        %v621 = vunpack.c.l.b16 %v298
        %v622 = vunpack.c.h.b16 %v298
        %v623 = vunpack.c.l.b16 %v299
        %v624 = vunpack.c.h.b16 %v299
        %v625 = vunpack.c.l.b16 %v300
        %v626 = vunpack.c.h.b16 %v300
        %v627 = vunpack.c.l.b16 %v301
        %v628 = vunpack.c.h.b16 %v301
        %v629 = vunpack.c.l.b16 %v302
        %v630 = vunpack.c.h.b16 %v302
        %v631 = vunpack.c.l.b16 %v303
        %v632 = vunpack.c.h.b16 %v303
        %v633 = vunpack.c.l.b16 %v304
        %v634 = vunpack.c.h.b16 %v304
        %v635 = vunpack.c.l.b16 %v305
        %v636 = vunpack.c.h.b16 %v305
        %v637 = vunpack.c.l.b16 %v306
        %v638 = vunpack.c.h.b16 %v306
        %v639 = vunpack.c.l.b16 %v307
        %v640 = vunpack.c.h.b16 %v307
        %v641 = vunpack.c.l.b16 %v308
        %v642 = vunpack.c.h.b16 %v308
        %v643 = vunpack.c.l.b16 %v309
        %v644 = vunpack.c.h.b16 %v309
        %v645 = vunpack.c.l.b16 %v310
        %v646 = vunpack.c.h.b16 %v310
        %v647 = vunpack.c.l.b16 %v311
        %v648 = vunpack.c.h.b16 %v311
        %v649 = vunpack.c.l.b16 %v312
        %v650 = vunpack.c.h.b16 %v312
        %v651 = vunpack.c.l.b16 %v313
        %v652 = vunpack.c.h.b16 %v313
        %v653 = vunpack.c.l.b16 %v314
        %v654 = vunpack.c.h.b16 %v314
        %v655 = vunpack.c.l.b16 %v315
        %v656 = vunpack.c.h.b16 %v315
        %v657 = vunpack.c.l.b16 %v316
        %v658 = vunpack.c.h.b16 %v316
        %v659 = vunpack.c.l.b16 %v317
        %v660 = vunpack.c.h.b16 %v317
        %v661 = vunpack.c.l.b16 %v318
        %v662 = vunpack.c.h.b16 %v318
        %v663 = vunpack.c.l.b16 %v319
        %v664 = vunpack.c.h.b16 %v319
        %v665 = vunpack.c.l.b16 %v320
        %v666 = vunpack.c.h.b16 %v320
        %v667 = vunpack.c.l.b16 %v321
        %v668 = vunpack.c.h.b16 %v321
        %v669 = vunpack.c.l.b16 %v322
        %v670 = vunpack.c.h.b16 %v322
        %v671 = vunpack.c.l.b16 %v323
        %v672 = vunpack.c.h.b16 %v323
        %v673 = vunpack.c.l.b16 %v324
        %v674 = vunpack.c.h.b16 %v324
        %v675 = vunpack.c.l.b16 %v325
        %v676 = vunpack.c.h.b16 %v325
        %v677 = vunpack.c.l.b16 %v326
        %v678 = vunpack.c.h.b16 %v326
        %v679 = vunpack.c.l.b16 %v327
        %v680 = vunpack.c.h.b16 %v327
        %v681 = vunpack.c.l.b16 %v328
        %v682 = vunpack.c.h.b16 %v328
        %v683 = vunpack.c.l.b16 %v329
        %v684 = vunpack.c.h.b16 %v329
        %v685 = vunpack.c.l.b16 %v330
        %v686 = vunpack.c.h.b16 %v330
        %v687 = vunpack.c.l.b16 %v331
        %v688 = vunpack.c.h.b16 %v331
        %v689 = vunpack.c.l.b16 %v332
        %v690 = vunpack.c.h.b16 %v332
        %v691 = vunpack.c.l.b16 %v333
        %v692 = vunpack.c.h.b16 %v333
        %v693 = vunpack.c.l.b16 %v334
        %v694 = vunpack.c.h.b16 %v334
        %v695 = vunpack.c.l.b16 %v335
        %v696 = vunpack.c.h.b16 %v335
        %v697 = vunpack.c.l.b16 %v336
        %v698 = vunpack.c.h.b16 %v336
        %v699 = vunpack.c.l.b16 %v337
        %v700 = vunpack.c.h.b16 %v337
        %v701 = vunpack.c.l.b16 %v338
        %v702 = vunpack.c.h.b16 %v338
        %v703 = vunpack.c.l.b16 %v339
        %v704 = vunpack.c.h.b16 %v339
        %v705 = vunpack.c.l.b16 %v340
        %v706 = vunpack.c.h.b16 %v340
        %v707 = vunpack.c.l.b16 %v341
        %v708 = vunpack.c.h.b16 %v341
        %v709 = vunpack.c.l.b16 %v342
        %v710 = vunpack.c.h.b16 %v342
        %v711 = vunpack.c.l.b16 %v343
        %v712 = vunpack.c.h.b16 %v343
        %v713 = vunpack.c.l.b16 %v344
        %v714 = vunpack.c.h.b16 %v344
        %v715 = vunpack.c.l.b16 %v345
        %v716 = vunpack.c.h.b16 %v345
        %v717 = vunpack.c.l.b16 %v346
        %v718 = vunpack.c.h.b16 %v346
        %v719 = vunpack.c.l.b16 %v347
        %v720 = vunpack.c.h.b16 %v347
        %v721 = vunpack.c.l.b16 %v348
        %v722 = vunpack.c.h.b16 %v348
        %v723 = vunpack.c.l.b16 %v349
        %v724 = vunpack.c.h.b16 %v349
        %v725 = vunpack.c.l.b16 %v350
        %v726 = vunpack.c.h.b16 %v350
        %v727 = vunpack.c.l.b16 %v351
        %v728 = vunpack.c.h.b16 %v351
        %v729 = vunpack.c.l.b16 %v352
        %v730 = vunpack.c.h.b16 %v352
        %v731 = vunpack.c.l.b16 %v353
        %v732 = vunpack.c.h.b16 %v353
        %v733 = vunpack.c.l.b16 %v354
        %v734 = vunpack.c.h.b16 %v354
        %v735 = vunpack.c.l.b16 %v355
        %v736 = vunpack.c.h.b16 %v355
        %v737 = vunpack.c.l.b16 %v356
        %v738 = vunpack.c.h.b16 %v356
        %v739 = vunpack.c.l.b16 %v357
        %v740 = vunpack.c.h.b16 %v357
        %v741 = vunpack.c.l.b16 %v358
        %v742 = vunpack.c.h.b16 %v358
        %v743 = vpack.c.b16 %v489, %v487
        %v744 = vpack.c.b16 %v490, %v488
        %v745 = vpack.c.b16 %v493, %v491
        %v746 = vpack.c.b16 %v494, %v492
        %v747 = vpack.c.b16 %v497, %v495
        %v748 = vpack.c.b16 %v498, %v496
        %v749 = vpack.c.b16 %v501, %v499
        %v750 = vpack.c.b16 %v502, %v500
        %v751 = vpack.c.b16 %v505, %v503
        %v752 = vpack.c.b16 %v506, %v504
        %v753 = vpack.c.b16 %v509, %v507
        %v754 = vpack.c.b16 %v510, %v508
        %v755 = vpack.c.b16 %v513, %v511
        %v756 = vpack.c.b16 %v514, %v512
        %v757 = vpack.c.b16 %v517, %v515
        %v758 = vpack.c.b16 %v518, %v516
        %v759 = vpack.c.b16 %v521, %v519
        %v760 = vpack.c.b16 %v522, %v520
        %v761 = vpack.c.b16 %v525, %v523
        %v762 = vpack.c.b16 %v526, %v524
        %v763 = vpack.c.b16 %v529, %v527
        %v764 = vpack.c.b16 %v530, %v528
        %v765 = vpack.c.b16 %v533, %v531
        %v766 = vpack.c.b16 %v534, %v532
        %v767 = vpack.c.b16 %v537, %v535
        %v768 = vpack.c.b16 %v538, %v536
        %v769 = vpack.c.b16 %v541, %v539
        %v770 = vpack.c.b16 %v542, %v540
        %v771 = vpack.c.b16 %v545, %v543
        %v772 = vpack.c.b16 %v546, %v544
        %v773 = vpack.c.b16 %v549, %v547
        %v774 = vpack.c.b16 %v550, %v548
        %v775 = vpack.c.b16 %v553, %v551
        %v776 = vpack.c.b16 %v554, %v552
        %v777 = vpack.c.b16 %v557, %v555
        %v778 = vpack.c.b16 %v558, %v556
        %v779 = vpack.c.b16 %v561, %v559
        %v780 = vpack.c.b16 %v562, %v560
        %v781 = vpack.c.b16 %v565, %v563
        %v782 = vpack.c.b16 %v566, %v564
        %v783 = vpack.c.b16 %v569, %v567
        %v784 = vpack.c.b16 %v570, %v568
        %v785 = vpack.c.b16 %v573, %v571
        %v786 = vpack.c.b16 %v574, %v572
        %v787 = vpack.c.b16 %v577, %v575
        %v788 = vpack.c.b16 %v578, %v576
        %v789 = vpack.c.b16 %v581, %v579
        %v790 = vpack.c.b16 %v582, %v580
        %v791 = vpack.c.b16 %v585, %v583
        %v792 = vpack.c.b16 %v586, %v584
        %v793 = vpack.c.b16 %v589, %v587
        %v794 = vpack.c.b16 %v590, %v588
        %v795 = vpack.c.b16 %v593, %v591
        %v796 = vpack.c.b16 %v594, %v592
        %v797 = vpack.c.b16 %v597, %v595
        %v798 = vpack.c.b16 %v598, %v596
        %v799 = vpack.c.b16 %v601, %v599
        %v800 = vpack.c.b16 %v602, %v600
        %v801 = vpack.c.b16 %v605, %v603
        %v802 = vpack.c.b16 %v606, %v604
        %v803 = vpack.c.b16 %v609, %v607
        %v804 = vpack.c.b16 %v610, %v608
        %v805 = vpack.c.b16 %v613, %v611
        %v806 = vpack.c.b16 %v614, %v612
        %v807 = vpack.c.b16 %v617, %v615
        %v808 = vpack.c.b16 %v618, %v616
        %v809 = vpack.c.b16 %v621, %v619
        %v810 = vpack.c.b16 %v622, %v620
        %v811 = vpack.c.b16 %v625, %v623
        %v812 = vpack.c.b16 %v626, %v624
        %v813 = vpack.c.b16 %v629, %v627
        %v814 = vpack.c.b16 %v630, %v628
        %v815 = vpack.c.b16 %v633, %v631
        %v816 = vpack.c.b16 %v634, %v632
        %v817 = vpack.c.b16 %v637, %v635
        %v818 = vpack.c.b16 %v638, %v636
        %v819 = vpack.c.b16 %v641, %v639
        %v820 = vpack.c.b16 %v642, %v640
        %v821 = vpack.c.b16 %v645, %v643
        %v822 = vpack.c.b16 %v646, %v644
        %v823 = vpack.c.b16 %v649, %v647
        %v824 = vpack.c.b16 %v650, %v648
        %v825 = vpack.c.b16 %v653, %v651
        %v826 = vpack.c.b16 %v654, %v652
        %v827 = vpack.c.b16 %v657, %v655
        %v828 = vpack.c.b16 %v658, %v656
        %v829 = vpack.c.b16 %v661, %v659
        %v830 = vpack.c.b16 %v662, %v660
        %v831 = vpack.c.b16 %v665, %v663
        %v832 = vpack.c.b16 %v666, %v664
        %v833 = vpack.c.b16 %v669, %v667
        %v834 = vpack.c.b16 %v670, %v668
        %v835 = vpack.c.b16 %v673, %v671
        %v836 = vpack.c.b16 %v674, %v672
        %v837 = vpack.c.b16 %v677, %v675
        %v838 = vpack.c.b16 %v678, %v676
        %v839 = vpack.c.b16 %v681, %v679
        %v840 = vpack.c.b16 %v682, %v680
        %v841 = vpack.c.b16 %v685, %v683
        %v842 = vpack.c.b16 %v686, %v684
        %v843 = vpack.c.b16 %v689, %v687
        %v844 = vpack.c.b16 %v690, %v688
        %v845 = vpack.c.b16 %v693, %v691
        %v846 = vpack.c.b16 %v694, %v692
        %v847 = vpack.c.b16 %v697, %v695
        %v848 = vpack.c.b16 %v698, %v696
        %v849 = vpack.c.b16 %v701, %v699
        %v850 = vpack.c.b16 %v702, %v700
        %v851 = vpack.c.b16 %v705, %v703
        %v852 = vpack.c.b16 %v706, %v704
        %v853 = vpack.c.b16 %v709, %v707
        %v854 = vpack.c.b16 %v710, %v708
        %v855 = vpack.c.b16 %v713, %v711
        %v856 = vpack.c.b16 %v714, %v712
        %v857 = vpack.c.b16 %v717, %v715
        %v858 = vpack.c.b16 %v718, %v716
        %v859 = vpack.c.b16 %v721, %v719
        %v860 = vpack.c.b16 %v722, %v720
        %v861 = vpack.c.b16 %v725, %v723
        %v862 = vpack.c.b16 %v726, %v724
        %v863 = vpack.c.b16 %v729, %v727
        %v864 = vpack.c.b16 %v730, %v728
        %v865 = vpack.c.b16 %v733, %v731
        %v866 = vpack.c.b16 %v734, %v732
        %v867 = vpack.c.b16 %v737, %v735
        %v868 = vpack.c.b16 %v738, %v736
        %v869 = vpack.c.b16 %v741, %v739
        %v870 = vpack.c.b16 %v742, %v740
        %999 = vmatprep.subr.bf16.mxu0 %v744
        %1000 = vmatpush1.bf16.msra.mxu0 %v743
        %1001 = vmatprep.subr.bf16.mxu0 %v746
        %1002 = vmatpush1.bf16.msra.mxu0 %v745
        %1003 = vmatprep.subr.bf16.mxu0 %v748
        %1004 = vmatpush1.bf16.msra.mxu0 %v747
        %1005 = vmatprep.subr.bf16.mxu0 %v750
        %1006 = vmatpush1.bf16.msra.mxu0 %v749
        %1007 = vmatprep.subr.bf16.mxu0 %v752
        %1008 = vmatpush1.bf16.msra.mxu0 %v751
        %1009 = vmatprep.subr.bf16.mxu0 %v754
        %1010 = vmatpush1.bf16.msra.mxu0 %v753
        %1011 = vmatprep.subr.bf16.mxu0 %v756
        %1012 = vmatpush1.bf16.msra.mxu0 %v755
        %1013 = vmatprep.subr.bf16.mxu0 %v758
        %1014 = vmatpush1.bf16.msra.mxu0 %v757
        %1015 = vmatprep.subr.bf16.mxu0 %v760
        %1016 = vmatpush1.bf16.msra.mxu0 %v759
        %1017 = vmatprep.subr.bf16.mxu0 %v762
        %1018 = vmatpush1.bf16.msra.mxu0 %v761
        %1019 = vmatprep.subr.bf16.mxu0 %v764
        %1020 = vmatpush1.bf16.msra.mxu0 %v763
        %1021 = vmatprep.subr.bf16.mxu0 %v766
        %1022 = vmatpush1.bf16.msra.mxu0 %v765
        %1023 = vmatprep.subr.bf16.mxu0 %v768
        %1024 = vmatpush1.bf16.msra.mxu0 %v767
        %1025 = vmatprep.subr.bf16.mxu0 %v770
        %1026 = vmatpush1.bf16.msra.mxu0 %v769
        %1027 = vmatprep.subr.bf16.mxu0 %v772
        %1028 = vmatpush1.bf16.msra.mxu0 %v771
        %1029 = vmatprep.subr.bf16.mxu0 %v774
        %1030 = vmatpush1.bf16.msra.mxu0 %v773
        %1031 = vmatprep.mubr.bf16.mxu0 %v224
        %1032 = vmatmul.mubr.bf16.gmra.mrb[0].mxu0 %v223
        %v1033 = vpop.f32.mrb[0].mxu0
        %v1034 = vadd.f32 0.0, %v1033
        %v1035 = vpop.f32.mrb[0].mxu0
        %v1036 = vadd.f32 0.0, %v1035
        %v1037 = vpop.f32.mrb[0].mxu0
        %v1038 = vpop.f32.mrb[0].mxu0
        %1039 = vdwg.mxu0
        %1040 = vmatprep.subr.bf16.mxu0 %v776
        %1041 = vmatpush1.bf16.msra.mxu0 %v775
        %1042 = vmatprep.subr.bf16.mxu0 %v778
        %1043 = vmatpush1.bf16.msra.mxu0 %v777
        %1044 = vmatprep.subr.bf16.mxu0 %v780
        %1045 = vmatpush1.bf16.msra.mxu0 %v779
        %1046 = vmatprep.subr.bf16.mxu0 %v782
        %1047 = vmatpush1.bf16.msra.mxu0 %v781
        %1048 = vmatprep.subr.bf16.mxu0 %v784
        %1049 = vmatpush1.bf16.msra.mxu0 %v783
        %1050 = vmatprep.subr.bf16.mxu0 %v786
        %1051 = vmatpush1.bf16.msra.mxu0 %v785
        %1052 = vmatprep.subr.bf16.mxu0 %v788
        %1053 = vmatpush1.bf16.msra.mxu0 %v787
        %1054 = vmatprep.subr.bf16.mxu0 %v790
        %1055 = vmatpush1.bf16.msra.mxu0 %v789
        %1056 = vmatprep.subr.bf16.mxu0 %v792
        %1057 = vmatpush1.bf16.msra.mxu0 %v791
        %1058 = vmatprep.subr.bf16.mxu0 %v794
        %1059 = vmatpush1.bf16.msra.mxu0 %v793
        %1060 = vmatprep.subr.bf16.mxu0 %v796
        %1061 = vmatpush1.bf16.msra.mxu0 %v795
        %1062 = vmatprep.subr.bf16.mxu0 %v798
        %1063 = vmatpush1.bf16.msra.mxu0 %v797
        %1064 = vmatprep.subr.bf16.mxu0 %v800
        %1065 = vmatpush1.bf16.msra.mxu0 %v799
        %1066 = vmatprep.subr.bf16.mxu0 %v802
        %1067 = vmatpush1.bf16.msra.mxu0 %v801
        %1068 = vmatprep.subr.bf16.mxu0 %v804
        %1069 = vmatpush1.bf16.msra.mxu0 %v803
        %1070 = vmatprep.subr.bf16.mxu0 %v806
        %1071 = vmatpush1.bf16.msra.mxu0 %v805
        %1072 = vmatprep.mubr.bf16.mxu0 %v226
        %1073 = vmatmul.mubr.bf16.gmra.mrb[0].mxu0 %v225
        %v1074 = vpop.f32.mrb[0].mxu0
        %v1075 = vadd.f32 %v1034, %v1074
        %v1076 = vpop.f32.mrb[0].mxu0
        %v1077 = vadd.f32 %v1036, %v1076
        %v1078 = vpop.f32.mrb[0].mxu0
        %v1079 = vpop.f32.mrb[0].mxu0
        %1080 = vdwg.mxu0
        %1081 = vmatprep.subr.bf16.mxu0 %v808
        %1082 = vmatpush1.bf16.msra.mxu0 %v807
        %1083 = vmatprep.subr.bf16.mxu0 %v810
        %1084 = vmatpush1.bf16.msra.mxu0 %v809
        %1085 = vmatprep.subr.bf16.mxu0 %v812
        %1086 = vmatpush1.bf16.msra.mxu0 %v811
        %1087 = vmatprep.subr.bf16.mxu0 %v814
        %1088 = vmatpush1.bf16.msra.mxu0 %v813
        %1089 = vmatprep.subr.bf16.mxu0 %v816
        %1090 = vmatpush1.bf16.msra.mxu0 %v815
        %1091 = vmatprep.subr.bf16.mxu0 %v818
        %1092 = vmatpush1.bf16.msra.mxu0 %v817
        %1093 = vmatprep.subr.bf16.mxu0 %v820
        %1094 = vmatpush1.bf16.msra.mxu0 %v819
        %1095 = vmatprep.subr.bf16.mxu0 %v822
        %1096 = vmatpush1.bf16.msra.mxu0 %v821
        %1097 = vmatprep.subr.bf16.mxu0 %v824
        %1098 = vmatpush1.bf16.msra.mxu0 %v823
        %1099 = vmatprep.subr.bf16.mxu0 %v826
        %1100 = vmatpush1.bf16.msra.mxu0 %v825
        %1101 = vmatprep.subr.bf16.mxu0 %v828
        %1102 = vmatpush1.bf16.msra.mxu0 %v827
        %1103 = vmatprep.subr.bf16.mxu0 %v830
        %1104 = vmatpush1.bf16.msra.mxu0 %v829
        %1105 = vmatprep.subr.bf16.mxu0 %v832
        %1106 = vmatpush1.bf16.msra.mxu0 %v831
        %1107 = vmatprep.subr.bf16.mxu0 %v834
        %1108 = vmatpush1.bf16.msra.mxu0 %v833
        %1109 = vmatprep.subr.bf16.mxu0 %v836
        %1110 = vmatpush1.bf16.msra.mxu0 %v835
        %1111 = vmatprep.subr.bf16.mxu0 %v838
        %1112 = vmatpush1.bf16.msra.mxu0 %v837
        %1113 = vmatprep.mubr.bf16.mxu0 %v228
        %1114 = vmatmul.mubr.bf16.gmra.mrb[0].mxu0 %v227
        %v1115 = vpop.f32.mrb[0].mxu0
        %v1116 = vadd.f32 %v1075, %v1115
        %v1117 = vpop.f32.mrb[0].mxu0
        %v1118 = vadd.f32 %v1077, %v1117
        %v1119 = vpop.f32.mrb[0].mxu0
        %v1120 = vpop.f32.mrb[0].mxu0
        %1121 = vdwg.mxu0
        %1122 = vmatprep.subr.bf16.mxu0 %v840
        %1123 = vmatpush1.bf16.msra.mxu0 %v839
        %1124 = vmatprep.subr.bf16.mxu0 %v842
        %1125 = vmatpush1.bf16.msra.mxu0 %v841
        %1126 = vmatprep.subr.bf16.mxu0 %v844
        %1127 = vmatpush1.bf16.msra.mxu0 %v843
        %1128 = vmatprep.subr.bf16.mxu0 %v846
        %1129 = vmatpush1.bf16.msra.mxu0 %v845
        %1130 = vmatprep.subr.bf16.mxu0 %v848
        %1131 = vmatpush1.bf16.msra.mxu0 %v847
        %1132 = vmatprep.subr.bf16.mxu0 %v850
        %1133 = vmatpush1.bf16.msra.mxu0 %v849
        %1134 = vmatprep.subr.bf16.mxu0 %v852
        %1135 = vmatpush1.bf16.msra.mxu0 %v851
        %1136 = vmatprep.subr.bf16.mxu0 %v854
        %1137 = vmatpush1.bf16.msra.mxu0 %v853
        %1138 = vmatprep.subr.bf16.mxu0 %v856
        %1139 = vmatpush1.bf16.msra.mxu0 %v855
        %1140 = vmatprep.subr.bf16.mxu0 %v858
        %1141 = vmatpush1.bf16.msra.mxu0 %v857
        %1142 = vmatprep.subr.bf16.mxu0 %v860
        %1143 = vmatpush1.bf16.msra.mxu0 %v859
        %1144 = vmatprep.subr.bf16.mxu0 %v862
        %1145 = vmatpush1.bf16.msra.mxu0 %v861
        %1146 = vmatprep.subr.bf16.mxu0 %v864
        %1147 = vmatpush1.bf16.msra.mxu0 %v863
        %1148 = vmatprep.subr.bf16.mxu0 %v866
        %1149 = vmatpush1.bf16.msra.mxu0 %v865
        %1150 = vmatprep.subr.bf16.mxu0 %v868
        %1151 = vmatpush1.bf16.msra.mxu0 %v867
        %1152 = vmatprep.subr.bf16.mxu0 %v870
        %1153 = vmatpush1.bf16.msra.mxu0 %v869
        %1154 = vmatprep.mubr.bf16.mxu0 %v230
        %1155 = vmatmul.mubr.bf16.gmra.mrb[0].mxu0 %v229
        %v1156 = vpop.f32.mrb[0].mxu0
        %v1157 = vadd.f32 %v1116, %v1156
        %v1158 = vpop.f32.mrb[0].mxu0
        %v1159 = vadd.f32 %v1118, %v1158
        %v1160 = vpop.f32.mrb[0].mxu0
        %v1161 = vpop.f32.mrb[0].mxu0
        %1162 = vdwg.mxu0
        %v1165 = vcombine.low %v1157, %v1159
        %v1167 = vunpack.c.l.s4 1983009808
        %v1168 = vunpack.c.0.s8 %v1167
        %v1169 = vlaneseq
        %v1170 = vshrl.u32 %v1169, 7
        %v1171 = vsub.s32 %v1168, %v1170
        %v1172 = vrot.slane %v1165, %v1171
        %1174 = vst [vmem:[%s174] sm:$0xf] %v1172
        %s1175 = sand.u32 %s75, 1
        %s1176 = scalar_lea.sflag [#allocation4], %s1175
        %s1177 = sand.u32 %s75, 1
        %s1178 = smul.addr %s1177, 4
        %s1179 = scalar_lea.vmem [#allocation7], %s1178
        // Predicated region
        $region37: #{tpu_custom_call.1} parent=27 // pred_check
          %p1180 = pneg %p85
        $region38: #{tpu_custom_call.1} parent=27 // pred_check_branch
          %1182 = sbr.rel (%p1180) target = $region40
        $region39: #{tpu_custom_call.1} parent=27 // pred_region
          %s1183 = smul.u32 2, %s20
          %s1185 = ssub.s32 64, 64
          %1186 = vsyncadd %s1176, %s1185
          %s1187 = smul.addr %s1183, 32
          %s1188 = scalar_lea.hbm %s2, %s1187
          %s1190 = sshll.u32 %s1179, 4
          %s1191 = int_to_ptr.vmem [resolvable:$true] %s1190
          %1193 = dma.vmem_to_hbm [thread:$0]  %s1191, 64, %s1188, %s1176
        $region40: #{tpu_custom_call.1} parent=27 // pred_fallthru
          _
      $region28: #{tpu_custom_call.1} parent=5 // pred_fallthru
        _
      %p1194 = scmp.le.s32.totalorder 2, %s15
      // Predicated region
      $region41: #{tpu_custom_call.1} parent=5 // pred_check
        %p1195 = pneg %p1194
      $region42: #{tpu_custom_call.1} parent=5 // pred_check_branch
        %1197 = sbr.rel (%p1195) target = $region44
      $region43: #{tpu_custom_call.1} parent=5 // pred_region
        %s1198 = ssub.s32 %s15, 2
        // Predicated region
        $region45: #{tpu_custom_call.1} parent=43 // pred_check
          %p1199 = pneg %p91
        $region46: #{tpu_custom_call.1} parent=43 // pred_check_branch
          %1201 = sbr.rel (%p1199) target = $region48
        $region47: #{tpu_custom_call.1} parent=43 // pred_region
          %s1202 = sand.u32 %s76, 1
          %s1203 = scalar_lea.sflag [#allocation4], %s1202
          %s1204 = sand.u32 %s76, 1
          %s1205 = smul.addr %s1204, 4
          %s1206 = scalar_lea.vmem [#allocation7], %s1205
          %1207 = dma.done %s1203, 64
        $region48: #{tpu_custom_call.1} parent=43 // pred_fallthru
          _
      $region44: #{tpu_custom_call.1} parent=5 // pred_fallthru
        _
    $region6: #{tpu_custom_call.1} parent=1 // loop_footer
      %s19 = sadd.s32 1, %s15
    $region7: #{tpu_custom_call.1} parent=1 // loop_footer_branch
      %14 = sbr.rel target = $region3
    $region8: #{tpu_custom_call.1} parent=1 // loop_exit
      _
    %1208 = vsyncpa [#allocation3], 1
    %s1209 = scalar_lea.sflag [#allocation3], 1
    %1210 = vsyncpa %s1209, 1
    %1211 = vsyncpa [#allocation6], 1
    %s1212 = scalar_lea.sflag [#allocation6], 1
    %1213 = vsyncpa %s1212, 1
    %1214 = vsyncpa [#allocation4], 1
    %s1215 = scalar_lea.sflag [#allocation4], 1
    %1216 = vsyncpa %s1215, 1

</llo_original>
